<compile_context>
chip_gen: v7x
topology: tpu7x:2x2x1
jax: 0.10.0
libtpu: 0.0.40
codegen_flags: <defaults>
</compile_context>

<pallas_src>
import jax
import jax.numpy as jnp
import numpy as np
from jax.experimental import pallas as pl
from jax.experimental.pallas import tpu as pltpu


# ----------------------------------------------------------------------------
# Kernel 1: backbone stand-in — tiled patch-conv matmul + bias + ReLU,
#           with AdaptiveAvgPool2d(1) fused into the K-epilogue.
# ----------------------------------------------------------------------------
def conv_proj_pool(patches, w, b, hw, *, tn=None, tk=None):
    """patches: (M, K) bf16, w: (K, F) bf16, b: (1, F) f32, hw = HO*WO.

    Returns (fmap_flat (M, F) f32, pooled (M//hw, F) f32) where
    fmap_flat = relu(patches @ w + b) and pooled = per-frame spatial mean.
    """
    M, K = patches.shape
    Kw, F = w.shape
    assert Kw == K
    assert M % hw == 0
    n_frames = M // hw

    # --- K tile: pick a divisor, else zero-pad K to a multiple of 128 -------
    if tk is None:
        tk = next((c for c in (1024, 512, 256, 128) if K % c == 0), None)
        if tk is None:
            pad = (-K) % 128
            patches = jnp.pad(patches, ((0, 0), (0, pad)))
            w = jnp.pad(w, ((0, pad), (0, 0)))
            K += pad
            tk = 128
    kt = K // tk

    # --- N (=F) tile ---------------------------------------------------------
    if tn is None:
        tn = 256 if (F % 256 == 0 and F > 256) else (128 if F % 128 == 0 else F)
    nt = F // tn

    # --- M tile: whole frames per tile so pooling stays block-local ---------
    if M <= 512:
        fpt, tm = n_frames, M            # single M tile (demo sizes)
    else:
        fpt = next((f for f in (32, 16, 8) if n_frames % f == 0), n_frames)
        tm = fpt * hw
    mt = M // tm

    def kernel(a_ref, w_ref, b_ref, o_ref, p_ref):
        k = pl.program_id(2)

        @pl.when(k == 0)
        def _():
            o_ref[...] = jnp.zeros_like(o_ref)

        # bf16 x bf16 -> f32 accumulation directly into the VMEM-resident
        # output block (constant block index over the K axis).
        o_ref[...] += jnp.dot(a_ref[...], w_ref[...],
                              preferred_element_type=jnp.float32)

        @pl.when(k == kt - 1)
        def _():
            y = jnp.maximum(o_ref[...] + b_ref[...], 0.0)
            o_ref[...] = y
            # fused AdaptiveAvgPool2d(1): per-frame spatial mean.
            p_ref[...] = jnp.mean(y.reshape(fpt, hw, tn), axis=1)

    return pl.pallas_call(
        kernel,
        out_shape=(jax.ShapeDtypeStruct((M, F), jnp.float32),
                   jax.ShapeDtypeStruct((n_frames, F), jnp.float32)),
        grid_spec=pltpu.PrefetchScalarGridSpec(
            num_scalar_prefetch=0,
            grid=(mt, nt, kt),                 # K innermost (reduction)
            in_specs=[
                pl.BlockSpec((tm, tk), lambda i, j, k: (i, k)),
                pl.BlockSpec((tk, tn), lambda i, j, k: (k, j)),
                pl.BlockSpec((1, tn), lambda i, j, k: (0, j)),
            ],
            out_specs=(
                pl.BlockSpec((tm, tn), lambda i, j, k: (i, j)),
                pl.BlockSpec((fpt, tn), lambda i, j, k: (i, j)),
            ),
        ),
        compiler_params=pltpu.CompilerParams(
            dimension_semantics=("parallel", "parallel", "arbitrary")),
    )(patches, w, b)


# ----------------------------------------------------------------------------
# Kernel 2: fused LSTM head — hoisted input projection + recurrence
#           (PyTorch gate order i, f, g, o) + x_lstm[:, -1, :] selection +
#           final Linear(F -> num_classes), all in one launch.
# ----------------------------------------------------------------------------
def lstm_head(pooled, wih_t, lstm_b, whh_t, lin_w, lin_b, *, seq_batch):
    """pooled: (T*S, F) f32 pooled frame features, row order n = t*S + s,
    where T = PyTorch batch dim (nn.LSTM *time*) and S = seq_batch = PyTorch
    seq dim (nn.LSTM *batch*).  h0 = c0 = 0.

    wih_t: (F, 4F) = W_ih^T, lstm_b: (1, 4F) = b_ih + b_hh,
    whh_t: (F, 4F) = W_hh^T, lin_w: (F, NC), lin_b: (1, NC).
    Returns logits (T, NC) = linear(x_lstm[:, -1, :]) of the original module
    (hidden state of "batch" row S-1 at every time step, then Linear).
    """
    N, F = pooled.shape
    S = seq_batch
    assert N % S == 0
    T = N // S
    NC = lin_w.shape[1]

    def kernel(px_ref, wih_ref, b_ref, whh_ref, lw_ref, lb_ref, out_ref):
        # Hoisted input projection over all T*S rows: one batched MXU matmul
        # instead of T small ones inside the recurrence.
        gx = jnp.dot(px_ref[...], wih_ref[...],
                     preferred_element_type=jnp.float32) + b_ref[...]
        h = jnp.zeros((S, F), jnp.float32)
        c = jnp.zeros((S, F), jnp.float32)
        rows = []
        for t in range(T):                     # static, short unrolled loop
            gates = gx[t * S:(t + 1) * S] + jnp.dot(
                h, whh_ref[...], preferred_element_type=jnp.float32)
            i = jax.nn.sigmoid(gates[:, 0:F])
            f = jax.nn.sigmoid(gates[:, F:2 * F])
            g = jnp.tanh(gates[:, 2 * F:3 * F])
            o = jax.nn.sigmoid(gates[:, 3 * F:4 * F])
            c = f * c + i * g
            h = o * jnp.tanh(c)
            rows.append(h[S - 1:S, :])         # x_lstm[t, -1, :]
        hsel = jnp.concatenate(rows, axis=0)   # (T, F)
        out_ref[...] = (jnp.dot(hsel, lw_ref[...],
                                preferred_element_type=jnp.float32)
                        + lb_ref[...])

    return pl.pallas_call(
        kernel,
        out_shape=jax.ShapeDtypeStruct((T, NC), jnp.float32),
    )(pooled, wih_t, lstm_b, whh_t, lin_w, lin_b)


# ----------------------------------------------------------------------------
# Model wrapper (parameter setup + glue reshapes in plain JAX)
# ----------------------------------------------------------------------------
class PallasDeepFakeModel:
    def __init__(self, num_classes, *, feature_dim=256, patch=16, in_ch=3,
                 key=jax.random.PRNGKey(0)):
        # feature_dim stands in for the module's hard-coded 2048 latent/hidden
        # dim (kept small for the demo; all shapes scale identically).
        self.F = feature_dim
        self.patch = patch
        self.in_ch = in_ch
        k = jax.random.split(key, 7)
        kd = in_ch * patch * patch
        f = feature_dim
        self.conv_w = (jax.random.normal(k[0], (kd, f), jnp.float32)
                       / np.sqrt(kd)).astype(jnp.float32)
        self.conv_b = 0.01 * jax.random.normal(k[1], (1, f), jnp.float32)
        # LSTM: stored pre-transposed for x @ W; bias = b_ih + b_hh combined.
        self.wih_t = (jax.random.normal(k[2], (f, 4 * f), jnp.float32)
                      / np.sqrt(f)).astype(jnp.float32)
        self.whh_t = (jax.random.normal(k[3], (f, 4 * f), jnp.float32)
                      / np.sqrt(f)).astype(jnp.float32)
        self.lstm_b = 0.01 * jax.random.normal(k[4], (1, 4 * f), jnp.float32)
        # linear1: torch (num_classes, 2048) stored as (F, num_classes).
        self.lin_w = (jax.random.normal(k[5], (f, num_classes), jnp.float32)
                      / np.sqrt(f)).astype(jnp.float32)
        self.lin_b = 0.01 * jax.random.normal(k[6], (1, num_classes), jnp.float32)

    def __call__(self, x):
        # x: (B, S, C, H, W) float32, NCHW frames (PyTorch convention).
        B, S, C, H, W = x.shape
        P = self.patch
        F = self.F
        N = B * S
        HO, WO = H // P, W // P
        HW = HO * WO

        frames = x.reshape(N, C, H, W)
        # im2col for the stride-P patch conv
        patches = (frames.reshape(N, C, HO, P, WO, P)
                   .transpose(0, 2, 4, 1, 3, 5)
                   .reshape(N * HW, C * P * P))

        # Backbone stand-in (bf16 MXU, f32 accumulation) + fused avg-pool.
        fmap_flat, pooled = conv_proj_pool(
            patches.astype(jnp.bfloat16), self.conv_w.astype(jnp.bfloat16),
            self.conv_b, HW)
        fmap = fmap_flat.reshape(N, HO, WO, F).transpose(0, 3, 1, 2)  # NCHW

        # nn.LSTM sees dim0 = time (= B), dim1 = batch (= S).  One fused
        # kernel: hoisted input projection + recurrence + final Linear.
        logits = lstm_head(pooled, self.wih_t, self.lstm_b, self.whh_t,
                           self.lin_w, self.lin_b, seq_batch=S)
        # Dropout(0.4): identity (inference mode).
        return fmap, logits


# ----------------------------------------------------------------------------
# Pure-JAX reference for a correctness check
# ----------------------------------------------------------------------------
def reference_forward(model, x):
    B, S, C, H, W = x.shape
    P, F = model.patch, model.F
    N = B * S
    HO, WO = H // P, W // P
    frames = x.reshape(N, C, H, W)
    patches = (frames.reshape(N, C, HO, P, WO, P)
               .transpose(0, 2, 4, 1, 3, 5)
               .reshape(N * HO * WO, C * P * P))
    # mirror the bf16 MXU inputs of the Pallas path (f32 accumulation)
    p_bf = patches.astype(jnp.bfloat16).astype(jnp.float32)
    w_bf = model.conv_w.astype(jnp.bfloat16).astype(jnp.float32)
    fmap_flat = jnp.maximum(p_bf @ w_bf + model.conv_b, 0.0)
    fmap = fmap_flat.reshape(N, HO, WO, F).transpose(0, 3, 1, 2)
    pooled = jnp.mean(fmap_flat.reshape(N, HO * WO, F), axis=1)
    x_seq = pooled.reshape(B, S, F)

    def step(carry, xt):
        h, c = carry
        gates = xt @ model.wih_t + h @ model.whh_t + model.lstm_b
        i = jax.nn.sigmoid(gates[:, :F])
        f = jax.nn.sigmoid(gates[:, F:2 * F])
        g = jnp.tanh(gates[:, 2 * F:3 * F])
        o = jax.nn.sigmoid(gates[:, 3 * F:])
        c = f * c + i * g
        h = o * jnp.tanh(c)
        return (h, c), h

    init = (jnp.zeros((S, F), jnp.float32), jnp.zeros((S, F), jnp.float32))
    _, ys = jax.lax.scan(step, init, x_seq)
    h_last = ys[:, -1, :]
    logits = h_last @ model.lin_w + model.lin_b
    return fmap, logits


if __name__ == "__main__":
    B, S, C, H, W = 2, 3, 3, 32, 32      # small shapes; seq of 3 frames
    num_classes = 2
    key = jax.random.PRNGKey(0)
    k_param, k_x = jax.random.split(key)

    model = PallasDeepFakeModel(num_classes, feature_dim=256, patch=16,
                                in_ch=C, key=k_param)
    x = jax.random.normal(k_x, (B, S, C, H, W), jnp.float32)

    fmap, logits = model(x)
    jax.block_until_ready((fmap, logits))

    fmap_ref, logits_ref = reference_forward(model, x)
    np.testing.assert_allclose(np.asarray(fmap), np.asarray(fmap_ref),
                               rtol=2e-2, atol=2e-2)
    np.testing.assert_allclose(np.asarray(logits), np.asarray(logits_ref),
                               rtol=2e-2, atol=2e-2)

    assert fmap.shape == (B * S, model.F, H // model.patch, W // model.patch)
    assert logits.shape == (B, num_classes)
    print("KERNEL_OK")
</pallas_src>

<mosaic_0001>
module attributes {stable_mosaic.version = 11 : i64} {
  func.func @kernel(%arg0: i32, %arg1: i32, %arg2: i32, %arg3: memref<24x256xbf16, #tpu.memory_space<vmem>>, %arg4: memref<256x128xbf16, #tpu.memory_space<vmem>>, %arg5: memref<1x128xf32, #tpu.memory_space<vmem>>, %arg6: memref<24x128xf32, #tpu.memory_space<vmem>>, %arg7: memref<6x128xf32, #tpu.memory_space<vmem>>) attributes {dimension_semantics = [#tpu.dimension_semantics<parallel>, #tpu.dimension_semantics<parallel>, #tpu.dimension_semantics<arbitrary>], iteration_bounds = array<i64: 1, 2, 3>, scalar_prefetch = 0 : i64, scratch_operands = 0 : i64, tpu.core_type = #tpu.core_type<tc>, window_params = [{transform_indices = @transform_0, window_bounds = array<i64: 24, 256>}, {transform_indices = @transform_1, window_bounds = array<i64: 256, 128>}, {transform_indices = @transform_2, window_bounds = array<i64: 1, 128>}, {transform_indices = @transform_3, window_bounds = array<i64: 24, 128>}, {transform_indices = @transform_4, window_bounds = array<i64: 6, 128>}]} {
    %c0_i32 = arith.constant 0 : i32
    %0 = arith.cmpi eq, %arg2, %c0_i32 : i32
    %1 = arith.extui %0 : i1 to i32
    %c0_i32_0 = arith.constant 0 : i32
    %2 = arith.cmpi ne, %1, %c0_i32_0 : i32
    scf.if %2 {
      %cst_9 = arith.constant 0.000000e+00 : f32
      %12 = vector.broadcast %cst_9 : f32 to vector<24x128xf32>
      %c0_10 = arith.constant 0 : index
      %c0_11 = arith.constant 0 : index
      %13 = vector.load %arg6[%c0_10, %c0_11] : memref<24x128xf32, #tpu.memory_space<vmem>>, vector<24x128xf32>
      tpu.vector_store %arg6[%c0_10, %c0_11], %12 {strides = array<i32>} : memref<24x128xf32, #tpu.memory_space<vmem>>, vector<24x128xf32>,
    } else {
    }
    %c0 = arith.constant 0 : index
    %c0_1 = arith.constant 0 : index
    %3 = vector.load %arg6[%c0, %c0_1] : memref<24x128xf32, #tpu.memory_space<vmem>>, vector<24x128xf32>
    %c0_2 = arith.constant 0 : index
    %c0_3 = arith.constant 0 : index
    %4 = vector.load %arg3[%c0_2, %c0_3] : memref<24x256xbf16, #tpu.memory_space<vmem>>, vector<24x256xbf16>
    %c0_4 = arith.constant 0 : index
    %c0_5 = arith.constant 0 : index
    %5 = vector.load %arg4[%c0_4, %c0_5] : memref<256x128xbf16, #tpu.memory_space<vmem>>, vector<256x128xbf16>
    %cst = arith.constant dense<0.000000e+00> : vector<24x128xf32>
    %6 = tpu.matmul %4, %5, %cst {dimension_numbers = #tpu.dot_dimension_numbers<[1], [0], [0], [1], [0, 0, 1, 1], [], []>} : vector<24x256xbf16>, vector<256x128xbf16>, vector<24x128xf32> -> vector<24x128xf32>
    %7 = arith.addf %3, %6 : vector<24x128xf32>
    %c0_6 = arith.constant 0 : index
    %c0_7 = arith.constant 0 : index
    %8 = vector.load %arg6[%c0_6, %c0_7] : memref<24x128xf32, #tpu.memory_space<vmem>>, vector<24x128xf32>
    tpu.vector_store %arg6[%c0_6, %c0_7], %7 {strides = array<i32>} : memref<24x128xf32, #tpu.memory_space<vmem>>, vector<24x128xf32>,
    %c2_i32 = arith.constant 2 : i32
    %9 = arith.cmpi eq, %arg2, %c2_i32 : i32
    %10 = arith.extui %9 : i1 to i32
    %c0_i32_8 = arith.constant 0 : i32
    %11 = arith.cmpi ne, %10, %c0_i32_8 : i32
    scf.if %11 {
      %c0_9 = arith.constant 0 : index
      %c0_10 = arith.constant 0 : index
      %12 = vector.load %arg6[%c0_9, %c0_10] : memref<24x128xf32, #tpu.memory_space<vmem>>, vector<24x128xf32>
      %c0_11 = arith.constant 0 : index
      %c0_12 = arith.constant 0 : index
      %13 = vector.load %arg5[%c0_11, %c0_12] : memref<1x128xf32, #tpu.memory_space<vmem>>, vector<1x128xf32>
      %14 = vector.broadcast %13 : vector<1x128xf32> to vector<24x128xf32>
      %15 = arith.addf %12, %14 : vector<24x128xf32>
      %cst_13 = arith.constant 0.000000e+00 : f32
      %16 = vector.broadcast %cst_13 : f32 to vector<24x128xf32>
      %17 = arith.maximumf %15, %16 : vector<24x128xf32>
      %c0_14 = arith.constant 0 : index
      %c0_15 = arith.constant 0 : index
      %18 = vector.load %arg6[%c0_14, %c0_15] : memref<24x128xf32, #tpu.memory_space<vmem>>, vector<24x128xf32>
      tpu.vector_store %arg6[%c0_14, %c0_15], %17 {strides = array<i32>} : memref<24x128xf32, #tpu.memory_space<vmem>>, vector<24x128xf32>,
      %19 = vector.shape_cast %17 : vector<24x128xf32> to vector<6x4x128xf32>
      %cst_16 = arith.constant dense<0.000000e+00> : vector<6x128xf32>
      %20 = vector.multi_reduction <add>, %19, %cst_16 [1] : vector<6x4x128xf32> to vector<6x128xf32>
      %cst_17 = arith.constant 4.000000e+00 : f32
      %21 = vector.broadcast %cst_17 : f32 to vector<6x128xf32>
      %22 = arith.divf %20, %21 : vector<6x128xf32>
      %c0_18 = arith.constant 0 : index
      %c0_19 = arith.constant 0 : index
      %23 = vector.load %arg7[%c0_18, %c0_19] : memref<6x128xf32, #tpu.memory_space<vmem>>, vector<6x128xf32>
      tpu.vector_store %arg7[%c0_18, %c0_19], %22 {strides = array<i32>} : memref<6x128xf32, #tpu.memory_space<vmem>>, vector<6x128xf32>,
    } else {
    }
    return
  }
  func.func @transform_0(%arg0: i32, %arg1: i32, %arg2: i32) -> (i32, i32) {
    %c0_i32 = arith.constant 0 : i32
    return %arg0, %arg2 : i32, i32
  }
  func.func @transform_1(%arg0: i32, %arg1: i32, %arg2: i32) -> (i32, i32) {
    %c0_i32 = arith.constant 0 : i32
    return %arg2, %arg1 : i32, i32
  }
  func.func @transform_2(%arg0: i32, %arg1: i32, %arg2: i32) -> (i32, i32) {
    %c0_i32 = arith.constant 0 : i32
    %c0_i32_0 = arith.constant 0 : i32
    return %c0_i32, %arg1 : i32, i32
  }
  func.func @transform_3(%arg0: i32, %arg1: i32, %arg2: i32) -> (i32, i32) {
    %c0_i32 = arith.constant 0 : i32
    return %arg0, %arg1 : i32, i32
  }
  func.func @transform_4(%arg0: i32, %arg1: i32, %arg2: i32) -> (i32, i32) {
    %c0_i32 = arith.constant 0 : i32
    return %arg0, %arg1 : i32, i32
  }
}

</mosaic_0001>

<llo_original>
// kernel: tpu_custom_call.1
$region0: #{tpu_custom_call.1}
  #allocation0 [shape = 'u32[]', space=smem, size = 0x4, offset = 0x4, fixed_abs, tag = 'smem constant byte address 0x4 - core index']
  #allocation1 [shape = 'u32[144,128]{1,0:T(1,128)}', space=vmem, size = 0x12000, scoped, tag = 'internal scratch']
  %s0 = inlined_call_operand.hbm [shape: bf16[24,768], index: 0, kind: input, shape index: {}]
  %s1 = inlined_call_operand.hbm [shape: bf16[768,256], index: 1, kind: input, shape index: {}]
  %s2 = inlined_call_operand.vmem [shape: f32[1,256], index: 2, kind: input, shape index: {}]
  %s3 = inlined_call_operand.hbm [shape: f32[24,256], index: 3, kind: output, shape index: {0}]
  %s4 = inlined_call_operand.hbm [shape: f32[6,256], index: 4, kind: output, shape index: {1}]
  %5 = xla_tuple %s3, %s4
  %s6 = sld [smem:[#allocation0]]
  $region69: #{tpu_custom_call.1} parent=0
    _
  %s8 = ssub.s32 1, %s6
  %s9 = scalar_select 0, %s8, %s6
  $region1: #{tpu_custom_call.1} parent=0
    #allocation2 [shape = 'u8[24576]{0}', space=vmem, size = 0x6000, scoped, tag = 'input window, operand 0']
    #allocation3 [shape = 's32[2]{0}', space=sflag, size = 0x8, scoped, tag = 'scoped memory for tpu_custom_call.1']
    #allocation4 [shape = 's32[2]{0}', space=sflag, size = 0x8, scoped, tag = 'scoped memory for tpu_custom_call.1']
    #allocation5 [shape = 'u8[131072]{0}', space=vmem, size = 0x20000, scoped, tag = 'input window, operand 1']
    #allocation6 [shape = 's32[2]{0}', space=sflag, size = 0x8, scoped, tag = 'scoped memory for tpu_custom_call.1']
    #allocation7 [shape = 'u8[24576]{0}', space=vmem, size = 0x6000, scoped, tag = 'output window, operand 0']
    #allocation8 [shape = 'u8[8192]{0}', space=vmem, size = 0x2000, scoped, tag = 'output window, operand 1']
    #allocation9 [shape = 's32[2]{0}', space=sflag, size = 0x8, scoped, tag = 'scoped memory for tpu_custom_call.1']
    %10 = vsyncpa [#allocation3], 0
    %s11 = scalar_lea.sflag [#allocation3], 1
    %12 = vsyncpa %s11, 0
    %13 = vsyncpa [#allocation6], 0
    %s14 = scalar_lea.sflag [#allocation6], 1
    %15 = vsyncpa %s14, 0
    %16 = vsyncpa [#allocation4], 0
    %s17 = scalar_lea.sflag [#allocation4], 1
    %18 = vsyncpa %s17, 0
    %19 = vsyncpa [#allocation9], 0
    %s20 = scalar_lea.sflag [#allocation9], 1
    %21 = vsyncpa %s20, 0
    loop: start=0, step=1, limit=8
    $region2: #{tpu_custom_call.1} parent=1 // loop_pre_header
      _
    $region3: #{tpu_custom_call.1} parent=1 // loop_header
      %s23 = sphi 0, %s27
      %p24 = scmp.ge.s32.totalorder %s23, 8
      %s30 = sphi 0, %s49
      %s31 = sphi 0, %s45
      %s32 = sphi 0, %s41
      %s33 = sphi 0, %s30
      %s34 = sphi 0, %s31
      %s35 = sphi 0, %s32
      %s36 = sphi 0, %s33
      %s37 = sphi 0, %s34
      %s38 = sphi 0, %s35
      %s54 = sphi 0, %s56
      %s57 = sphi 0, %s54
      %s58 = sphi 0, %s57
      %s74 = sphi 0, %s58
      %s82 = sphi 0, %s84
      %s85 = sphi 0, %s82
      %s86 = sphi 0, %s85
      %s102 = sphi 0, %s86
      %s108 = sphi 0, %s110
      %s111 = sphi 0, %s108
      %s112 = sphi 0, %s111
      %s128 = sphi 0, %s112
      %s136 = sphi 0, %s138
      %s139 = sphi 0, %s136
      %s140 = sphi 0, %s139
      %s156 = sphi 0, %s140
      %s164 = sphi 0, %s166
      %s167 = sphi 0, %s164
      %s168 = sphi 0, %s167
      %s184 = sphi 0, %s168
    $region4: #{tpu_custom_call.1} parent=1 // loop_header_branch
      %26 = sbr.rel (%p24) target = $region8
    $region5: #{tpu_custom_call.1} parent=1 // loop_body
      %s28 = ssub.s32 %s23, 1
      %s29 = ssub.s32 %s23, 2
      %s39 = sadd.s32 1, %s32
      %p40 = scmp.ge.s32.totalorder %s39, 3
      %s41 = scalar_select %p40, 0, %s39
      %s42 = sadd.s32 1, %s31
      %s43 = scalar_select %p40, %s42, %s31
      %p44 = scmp.ge.s32.totalorder %s43, 2
      %s45 = scalar_select %p44, 0, %s43
      %s46 = sadd.s32 1, %s30
      %s47 = scalar_select %p44, %s46, %s30
      %p48 = scmp.ge.s32.totalorder %s47, 1
      %s49 = scalar_select %p48, 0, %s47
      %s50 = ssub.s32 %s30, %s49
      %s51 = ssub.s32 %s32, %s41
      %s52 = sor.u32 %s50, %s51
      %p53 = scmp.eq.s32.totalorder %s52, 0
      %s55 = sadd.s32 %s54, 1
      %s56 = scalar_select %p53, %s54, %s55
      %p59 = pneg %p53
      %p60 = scmp.eq.s32.totalorder %s23, 5
      %p61 = por %p59, %p60
      %p62 = scmp.ne.s32.totalorder %s54, %s57
      %p63 = scmp.eq.s32.totalorder %s23, 0
      %p64 = por %p62, %p63
      %p65 = scmp.ne.s32.totalorder %s54, %s57
      %p66 = scmp.eq.s32.totalorder %s28, 5
      %p67 = por %p65, %p66
      %p68 = scmp.ne.s32.totalorder %s57, %s58
      %p69 = scmp.eq.s32.totalorder %s28, 0
      %p70 = por %p68, %p69
      %p71 = scmp.ne.s32.totalorder %s57, %s58
      %p72 = scmp.eq.s32.totalorder %s29, 5
      %p73 = por %p71, %p72
      %p75 = scmp.ne.s32.totalorder %s58, %s74
      %p76 = scmp.eq.s32.totalorder %s29, 0
      %p77 = por %p75, %p76
      %s78 = ssub.s32 %s32, %s41
      %s79 = ssub.s32 %s31, %s45
      %s80 = sor.u32 %s78, %s79
      %p81 = scmp.eq.s32.totalorder %s80, 0
      %s83 = sadd.s32 %s82, 1
      %s84 = scalar_select %p81, %s82, %s83
      %p87 = pneg %p81
      %p88 = scmp.eq.s32.totalorder %s23, 5
      %p89 = por %p87, %p88
      %p90 = scmp.ne.s32.totalorder %s82, %s85
      %p91 = scmp.eq.s32.totalorder %s23, 0
      %p92 = por %p90, %p91
      %p93 = scmp.ne.s32.totalorder %s82, %s85
      %p94 = scmp.eq.s32.totalorder %s28, 5
      %p95 = por %p93, %p94
      %p96 = scmp.ne.s32.totalorder %s85, %s86
      %p97 = scmp.eq.s32.totalorder %s28, 0
      %p98 = por %p96, %p97
      %p99 = scmp.ne.s32.totalorder %s85, %s86
      %p100 = scmp.eq.s32.totalorder %s29, 5
      %p101 = por %p99, %p100
      %p103 = scmp.ne.s32.totalorder %s86, %s102
      %p104 = scmp.eq.s32.totalorder %s29, 0
      %p105 = por %p103, %p104
      %s106 = ssub.s32 %s31, %s45
      %p107 = scmp.eq.s32.totalorder %s106, 0
      %s109 = sadd.s32 %s108, 1
      %s110 = scalar_select %p107, %s108, %s109
      %p113 = pneg %p107
      %p114 = scmp.eq.s32.totalorder %s23, 5
      %p115 = por %p113, %p114
      %p116 = scmp.ne.s32.totalorder %s108, %s111
      %p117 = scmp.eq.s32.totalorder %s23, 0
      %p118 = por %p116, %p117
      %p119 = scmp.ne.s32.totalorder %s108, %s111
      %p120 = scmp.eq.s32.totalorder %s28, 5
      %p121 = por %p119, %p120
      %p122 = scmp.ne.s32.totalorder %s111, %s112
      %p123 = scmp.eq.s32.totalorder %s28, 0
      %p124 = por %p122, %p123
      %p125 = scmp.ne.s32.totalorder %s111, %s112
      %p126 = scmp.eq.s32.totalorder %s29, 5
      %p127 = por %p125, %p126
      %p129 = scmp.ne.s32.totalorder %s112, %s128
      %p130 = scmp.eq.s32.totalorder %s29, 0
      %p131 = por %p129, %p130
      %s132 = ssub.s32 %s30, %s49
      %s133 = ssub.s32 %s31, %s45
      %s134 = sor.u32 %s132, %s133
      %p135 = scmp.eq.s32.totalorder %s134, 0
      %s137 = sadd.s32 %s136, 1
      %s138 = scalar_select %p135, %s136, %s137
      %p141 = pneg %p135
      %p142 = scmp.eq.s32.totalorder %s23, 5
      %p143 = por %p141, %p142
      %p144 = scmp.ne.s32.totalorder %s136, %s139
      %p145 = scmp.eq.s32.totalorder %s23, 0
      %p146 = por %p144, %p145
      %p147 = scmp.ne.s32.totalorder %s136, %s139
      %p148 = scmp.eq.s32.totalorder %s28, 5
      %p149 = por %p147, %p148
      %p150 = scmp.ne.s32.totalorder %s139, %s140
      %p151 = scmp.eq.s32.totalorder %s28, 0
      %p152 = por %p150, %p151
      %p153 = scmp.ne.s32.totalorder %s139, %s140
      %p154 = scmp.eq.s32.totalorder %s29, 5
      %p155 = por %p153, %p154
      %p157 = scmp.ne.s32.totalorder %s140, %s156
      %p158 = scmp.eq.s32.totalorder %s29, 0
      %p159 = por %p157, %p158
      %s160 = ssub.s32 %s30, %s49
      %s161 = ssub.s32 %s31, %s45
      %s162 = sor.u32 %s160, %s161
      %p163 = scmp.eq.s32.totalorder %s162, 0
      %s165 = sadd.s32 %s164, 1
      %s166 = scalar_select %p163, %s164, %s165
      %p169 = pneg %p163
      %p170 = scmp.eq.s32.totalorder %s23, 5
      %p171 = por %p169, %p170
      %p172 = scmp.ne.s32.totalorder %s164, %s167
      %p173 = scmp.eq.s32.totalorder %s23, 0
      %p174 = por %p172, %p173
      %p175 = scmp.ne.s32.totalorder %s164, %s167
      %p176 = scmp.eq.s32.totalorder %s28, 5
      %p177 = por %p175, %p176
      %p178 = scmp.ne.s32.totalorder %s167, %s168
      %p179 = scmp.eq.s32.totalorder %s28, 0
      %p180 = por %p178, %p179
      %p181 = scmp.ne.s32.totalorder %s167, %s168
      %p182 = scmp.eq.s32.totalorder %s29, 5
      %p183 = por %p181, %p182
      %p185 = scmp.ne.s32.totalorder %s168, %s184
      %p186 = scmp.eq.s32.totalorder %s29, 0
      %p187 = por %p185, %p186
      %p188 = scmp.le.s32.totalorder 1, %s23
      %p189 = scmp.lt.s32.totalorder %s23, 7
      %p190 = pnand %p188, %p189
      %p191 = pneg %p190
      // Predicated region
      $region9: #{tpu_custom_call.1} parent=5 // pred_check
        _
      $region10: #{tpu_custom_call.1} parent=5 // pred_check_branch
        %193 = sbr.rel (%p190) target = $region12
      $region11: #{tpu_custom_call.1} parent=5 // pred_region
        %s194 = ssub.s32 %s23, 1
      $region12: #{tpu_custom_call.1} parent=5 // pred_fallthru
        _
      %p195 = scmp.lt.s32.totalorder %s23, 6
      // Predicated region
      $region13: #{tpu_custom_call.1} parent=5 // pred_check
        %p196 = pneg %p195
      $region14: #{tpu_custom_call.1} parent=5 // pred_check_branch
        %198 = sbr.rel (%p196) target = $region16
      $region15: #{tpu_custom_call.1} parent=5 // pred_region
        // Predicated region
        $region17: #{tpu_custom_call.1} parent=15 // pred_check
          %p199 = pneg %p64
        $region18: #{tpu_custom_call.1} parent=15 // pred_check_branch
          %201 = sbr.rel (%p199) target = $region20
        $region19: #{tpu_custom_call.1} parent=15 // pred_region
          %s202 = sand.u32 %s54, 1
          %s203 = scalar_lea.sflag [#allocation3], %s202
          %s204 = sand.u32 %s54, 1
          %s205 = smul.addr %s204, 24
          %s206 = scalar_lea.vmem [#allocation2], %s205
          %s207 = smul.u32 3, %s30
          %s208 = smul.u32 2, %s32
          %s210 = ssub.s32 384, 384
          %211 = vsyncadd %s203, %s210
          %s212 = smul.addr %s207, 6
          %s213 = sadd.s32 %s208, %s212
          %s214 = smul.addr %s213, 64
          %s215 = scalar_lea.hbm %s0, %s214
          %s216 = sshll.u32 %s206, 4
          %s217 = int_to_ptr.vmem [resolvable:$true] %s216
          %222 = dma.hbm_to_vmem [thread:$0]  %s215, 384, %s217, %s203, 384, 128, 8
        $region20: #{tpu_custom_call.1} parent=15 // pred_fallthru
          _
        // Predicated region
        $region21: #{tpu_custom_call.1} parent=15 // pred_check
          %p223 = pneg %p92
        $region22: #{tpu_custom_call.1} parent=15 // pred_check_branch
          %225 = sbr.rel (%p223) target = $region24
        $region23: #{tpu_custom_call.1} parent=15 // pred_region
          %s226 = sand.u32 %s82, 1
          %s227 = scalar_lea.sflag [#allocation6], %s226
          %s228 = sand.u32 %s82, 1
          %s229 = smul.addr %s228, 128
          %s230 = scalar_lea.vmem [#allocation5], %s229
          %s231 = smul.u32 32, %s32
          %s233 = ssub.s32 2048, 2048
          %234 = vsyncadd %s227, %s233
          %s235 = smul.addr %s231, 2
          %s236 = sadd.s32 %s31, %s235
          %s237 = smul.addr %s236, 64
          %s238 = scalar_lea.hbm %s1, %s237
          %s239 = sshll.u32 %s230, 4
          %s240 = int_to_ptr.vmem [resolvable:$true] %s239
          %245 = dma.hbm_to_vmem [thread:$0]  %s238, 2048, %s240, %s227, 128, 64, 4
        $region24: #{tpu_custom_call.1} parent=15 // pred_fallthru
          _
        // Predicated region
        $region25: #{tpu_custom_call.1} parent=15 // pred_check
          %p246 = pneg %p118
        $region26: #{tpu_custom_call.1} parent=15 // pred_check_branch
          %248 = sbr.rel (%p246) target = $region28
        $region27: #{tpu_custom_call.1} parent=15 // pred_region
          %p249 = scmp.lt.s32.totalorder %s31, 1
          %s250 = scalar_select %p249, %s31, 1
          %s251 = scalar_lea.vmem %s2, %s250
        $region28: #{tpu_custom_call.1} parent=15 // pred_fallthru
          _
      $region16: #{tpu_custom_call.1} parent=5 // pred_fallthru
        _
      %p252 = scmp.le.s32.totalorder 1, %s23
      %p253 = scmp.lt.s32.totalorder %s23, 7
      %p254 = pnand %p252, %p253
      %p255 = pneg %p254
      // Predicated region
      $region29: #{tpu_custom_call.1} parent=5 // pred_check
        _
      $region30: #{tpu_custom_call.1} parent=5 // pred_check_branch
        %257 = sbr.rel (%p254) target = $region32
      $region31: #{tpu_custom_call.1} parent=5 // pred_region
        %s258 = ssub.s32 %s23, 1
        %s259 = sand.u32 %s57, 1
        %s260 = scalar_lea.sflag [#allocation3], %s259
        %s261 = sand.u32 %s57, 1
        %s262 = smul.addr %s261, 24
        %s263 = scalar_lea.vmem [#allocation2], %s262
        // Predicated region
        $region33: #{tpu_custom_call.1} parent=31 // pred_check
          %p264 = pneg %p70
        $region34: #{tpu_custom_call.1} parent=31 // pred_check_branch
          %266 = sbr.rel (%p264) target = $region36
        $region35: #{tpu_custom_call.1} parent=31 // pred_region
          %267 = dma.done %s260, 384
        $region36: #{tpu_custom_call.1} parent=31 // pred_fallthru
          _
        %s268 = sand.u32 %s85, 1
        %s269 = scalar_lea.sflag [#allocation6], %s268
        %s270 = sand.u32 %s85, 1
        %s271 = smul.addr %s270, 128
        %s272 = scalar_lea.vmem [#allocation5], %s271
        // Predicated region
        $region37: #{tpu_custom_call.1} parent=31 // pred_check
          %p273 = pneg %p98
        $region38: #{tpu_custom_call.1} parent=31 // pred_check_branch
          %275 = sbr.rel (%p273) target = $region40
        $region39: #{tpu_custom_call.1} parent=31 // pred_region
          %276 = dma.done %s269, 2048
        $region40: #{tpu_custom_call.1} parent=31 // pred_fallthru
          _
        %s277 = sand.u32 %s57, 1
        %s278 = scalar_lea.sflag [#allocation3], %s277
        %s279 = sand.u32 %s57, 1
        %s280 = smul.addr %s279, 24
        %s281 = scalar_lea.vmem [#allocation2], %s280
        %p282 = pneg %p70
        %p283 = pneg %p67
        %s284 = sand.u32 %s85, 1
        %s285 = scalar_lea.sflag [#allocation6], %s284
        %s286 = sand.u32 %s85, 1
        %s287 = smul.addr %s286, 128
        %s288 = scalar_lea.vmem [#allocation5], %s287
        %p289 = pneg %p98
        %p290 = pneg %p95
        %p291 = scmp.lt.s32.totalorder %s34, 1
        %s292 = scalar_select %p291, %s34, 1
        %s293 = scalar_lea.vmem %s2, %s292
        %p294 = pneg %p124
        %p295 = pneg %p121
        %p296 = pneg %p152
        %p297 = pneg %p149
        %s298 = sand.u32 %s139, 1
        %s299 = scalar_lea.sflag [#allocation4], %s298
        %s300 = sand.u32 %s139, 1
        %s301 = smul.addr %s300, 24
        %s302 = scalar_lea.vmem [#allocation7], %s301
        %p303 = pneg %p180
        %p304 = pneg %p177
        %s305 = sand.u32 %s167, 1
        %s306 = scalar_lea.sflag [#allocation9], %s305
        %s307 = sand.u32 %s167, 1
        %s308 = smul.addr %s307, 8
        %s309 = scalar_lea.vmem [#allocation8], %s308
        %s310 = smul.u32 3, %s33
        %s311 = smul.u32 2, %s35
        %s312 = smul.u32 32, %s35
        %p313 = scmp.lt.s32.totalorder %s34, 1
        %s314 = scalar_select %p313, %s34, 1
        %s315 = scalar_lea.vmem %s2, %s314
        %s316 = smul.u32 3, %s33
        %p318 = scmp.eq.s32.totalorder %s35, 0
        // Predicated region
        $region41: #{tpu_custom_call.1} parent=31 // pred_check
          %p319 = pneg %p318
        $region42: #{tpu_custom_call.1} parent=31 // pred_check_branch
          %321 = sbr.rel (%p319) target = $region44
        $region43: #{tpu_custom_call.1} parent=31 // pred_region
          %322 = vst [vmem:[%s302] sm:$0xff] 0.0
          %323 = vst [vmem:[%s302 + $0x8] sm:$0xff] 0.0
          %324 = vst [vmem:[%s302 + $0x10] sm:$0xff] 0.0
        $region44: #{tpu_custom_call.1} parent=31 // pred_fallthru
          _
        %v325 = vld [vmem:[%s302] sm:$0xff]
        %v326 = vld [vmem:[%s302 + $0x8] sm:$0xff]
        %v327 = vld [vmem:[%s302 + $0x10] sm:$0xff]
        %v328 = vld [vmem:[%s263] sm:$0xff]
        %v329 = vld [vmem:[%s263 + $0x8] sm:$0xff]
        %v330 = vld [vmem:[%s263 + $0x10] sm:$0xff]
        %v331 = vld [vmem:[%s272] sm:$0xf]
        %v332 = vld [vmem:[%s272 + $0x4] sm:$0xf]
        %v333 = vld [vmem:[%s272 + $0x8] sm:$0xf]
        %v334 = vld [vmem:[%s272 + $0xc] sm:$0xf]
        %v335 = vld [vmem:[%s272 + $0x10] sm:$0xf]
        %v336 = vld [vmem:[%s272 + $0x14] sm:$0xf]
        %v337 = vld [vmem:[%s272 + $0x18] sm:$0xf]
        %v338 = vld [vmem:[%s272 + $0x1c] sm:$0xf]
        %v339 = vld [vmem:[%s272 + $0x20] sm:$0xf]
        %v340 = vld [vmem:[%s272 + $0x24] sm:$0xf]
        %v341 = vld [vmem:[%s272 + $0x28] sm:$0xf]
        %v342 = vld [vmem:[%s272 + $0x2c] sm:$0xf]
        %v343 = vld [vmem:[%s272 + $0x30] sm:$0xf]
        %v344 = vld [vmem:[%s272 + $0x34] sm:$0xf]
        %v345 = vld [vmem:[%s272 + $0x38] sm:$0xf]
        %v346 = vld [vmem:[%s272 + $0x3c] sm:$0xf]
        %v347 = vld [vmem:[%s272 + $0x40] sm:$0xf]
        %v348 = vld [vmem:[%s272 + $0x44] sm:$0xf]
        %v349 = vld [vmem:[%s272 + $0x48] sm:$0xf]
        %v350 = vld [vmem:[%s272 + $0x4c] sm:$0xf]
        %v351 = vld [vmem:[%s272 + $0x50] sm:$0xf]
        %v352 = vld [vmem:[%s272 + $0x54] sm:$0xf]
        %v353 = vld [vmem:[%s272 + $0x58] sm:$0xf]
        %v354 = vld [vmem:[%s272 + $0x5c] sm:$0xf]
        %v355 = vld [vmem:[%s272 + $0x60] sm:$0xf]
        %v356 = vld [vmem:[%s272 + $0x64] sm:$0xf]
        %v357 = vld [vmem:[%s272 + $0x68] sm:$0xf]
        %v358 = vld [vmem:[%s272 + $0x6c] sm:$0xf]
        %v359 = vld [vmem:[%s272 + $0x70] sm:$0xf]
        %v360 = vld [vmem:[%s272 + $0x74] sm:$0xf]
        %v361 = vld [vmem:[%s272 + $0x78] sm:$0xf]
        %v362 = vld [vmem:[%s272 + $0x7c] sm:$0xf]
        %v366 = vunpack.c.l.b16 %v328
        %v367 = vunpack.c.h.b16 %v328
        %v368 = vunpack.c.l.b16 %v329
        %v369 = vunpack.c.h.b16 %v329
        %v370 = vunpack.c.l.b16 %v330
        %v371 = vunpack.c.h.b16 %v330
        %v372 = vpack.c.b16 %v368, %v366
        %v373 = vpack.c.b16 %v369, %v367
        %v374 = vpack.c.b16 %v370, %v370
        %v375 = vpack.c.b16 %v371, %v371
        %v412 = vunpack.c.l.b16 %v331
        %v413 = vunpack.c.l.b16 %v332
        %v414 = vunpack.c.l.b16 %v333
        %v415 = vunpack.c.l.b16 %v334
        %v416 = vunpack.c.l.b16 %v335
        %v417 = vunpack.c.l.b16 %v336
        %v418 = vunpack.c.l.b16 %v337
        %v419 = vunpack.c.l.b16 %v338
        %v420 = vunpack.c.l.b16 %v339
        %v421 = vunpack.c.l.b16 %v340
        %v422 = vunpack.c.l.b16 %v341
        %v423 = vunpack.c.l.b16 %v342
        %v424 = vunpack.c.l.b16 %v343
        %v425 = vunpack.c.l.b16 %v344
        %v426 = vunpack.c.l.b16 %v345
        %v427 = vunpack.c.l.b16 %v346
        %v428 = vunpack.c.l.b16 %v347
        %v429 = vunpack.c.l.b16 %v348
        %v430 = vunpack.c.l.b16 %v349
        %v431 = vunpack.c.l.b16 %v350
        %v432 = vunpack.c.l.b16 %v351
        %v433 = vunpack.c.l.b16 %v352
        %v434 = vunpack.c.l.b16 %v353
        %v435 = vunpack.c.l.b16 %v354
        %v436 = vunpack.c.l.b16 %v355
        %v437 = vunpack.c.l.b16 %v356
        %v438 = vunpack.c.l.b16 %v357
        %v439 = vunpack.c.l.b16 %v358
        %v440 = vunpack.c.l.b16 %v359
        %v441 = vunpack.c.l.b16 %v360
        %v442 = vunpack.c.l.b16 %v361
        %v443 = vunpack.c.l.b16 %v362
        %v444 = vpack.c.b16 %v413, %v412
        %v445 = vpack.c.b16 %v415, %v414
        %v446 = vpack.c.b16 %v417, %v416
        %v447 = vpack.c.b16 %v419, %v418
        %v448 = vpack.c.b16 %v421, %v420
        %v449 = vpack.c.b16 %v423, %v422
        %v450 = vpack.c.b16 %v425, %v424
        %v451 = vpack.c.b16 %v427, %v426
        %v452 = vpack.c.b16 %v429, %v428
        %v453 = vpack.c.b16 %v431, %v430
        %v454 = vpack.c.b16 %v433, %v432
        %v455 = vpack.c.b16 %v435, %v434
        %v456 = vpack.c.b16 %v437, %v436
        %v457 = vpack.c.b16 %v439, %v438
        %v458 = vpack.c.b16 %v441, %v440
        %v459 = vpack.c.b16 %v443, %v442
        %476 = vmatprep.subr.bf16.mxu0 0
        %477 = vmatpush1.bf16.msra.mxu0 %v444
        %478 = vmatprep.subr.bf16.mxu0 0
        %479 = vmatpush1.bf16.msra.mxu0 %v445
        %480 = vmatprep.subr.bf16.mxu0 0
        %481 = vmatpush1.bf16.msra.mxu0 %v446
        %482 = vmatprep.subr.bf16.mxu0 0
        %483 = vmatpush1.bf16.msra.mxu0 %v447
        %484 = vmatprep.subr.bf16.mxu0 0
        %485 = vmatpush1.bf16.msra.mxu0 %v448
        %486 = vmatprep.subr.bf16.mxu0 0
        %487 = vmatpush1.bf16.msra.mxu0 %v449
        %488 = vmatprep.subr.bf16.mxu0 0
        %489 = vmatpush1.bf16.msra.mxu0 %v450
        %490 = vmatprep.subr.bf16.mxu0 0
        %491 = vmatpush1.bf16.msra.mxu0 %v451
        %492 = vmatprep.subr.bf16.mxu0 0
        %493 = vmatpush1.bf16.msra.mxu0 %v452
        %494 = vmatprep.subr.bf16.mxu0 0
        %495 = vmatpush1.bf16.msra.mxu0 %v453
        %496 = vmatprep.subr.bf16.mxu0 0
        %497 = vmatpush1.bf16.msra.mxu0 %v454
        %498 = vmatprep.subr.bf16.mxu0 0
        %499 = vmatpush1.bf16.msra.mxu0 %v455
        %500 = vmatprep.subr.bf16.mxu0 0
        %501 = vmatpush1.bf16.msra.mxu0 %v456
        %502 = vmatprep.subr.bf16.mxu0 0
        %503 = vmatpush1.bf16.msra.mxu0 %v457
        %504 = vmatprep.subr.bf16.mxu0 0
        %505 = vmatpush1.bf16.msra.mxu0 %v458
        %506 = vmatprep.subr.bf16.mxu0 0
        %507 = vmatpush1.bf16.msra.mxu0 %v459
        %508 = vmatprep.mubr.bf16.mxu0 %v373
        %509 = vmatmul.mubr.bf16.gmra.mrb[0].mxu0 %v372
        %v510 = vpop.f32.mrb[0].mxu0
        %v511 = vadd.f32 0.0, %v510
        %v512 = vpop.f32.mrb[0].mxu0
        %v513 = vpop.f32.mrb[0].mxu0
        %v514 = vadd.f32 0.0, %v513
        %v515 = vpop.f32.mrb[0].mxu0
        %516 = vmatprep.mubr.bf16.mxu0 %v375
        %517 = vmatmul.mubr.bf16.gmra.mrb[0].mxu0 %v374
        %v518 = vpop.f32.mrb[0].mxu0
        %v519 = vadd.f32 0.0, %v518
        %v520 = vpop.f32.mrb[0].mxu0
        %v521 = vpop.f32.mrb[0].mxu0
        %v522 = vpop.f32.mrb[0].mxu0
        %523 = vdwg.mxu0
        %v524 = vadd.f32 %v325, %v511
        %v525 = vadd.f32 %v326, %v514
        %v526 = vadd.f32 %v327, %v519
        %527 = vst [vmem:[%s302] sm:$0xff] %v524
        %528 = vst [vmem:[%s302 + $0x8] sm:$0xff] %v525
        %529 = vst [vmem:[%s302 + $0x10] sm:$0xff] %v526
        %p530 = scmp.eq.s32.totalorder %s35, 2
        // Predicated region
        $region45: #{tpu_custom_call.1} parent=31 // pred_check
          %p531 = pneg %p530
        $region46: #{tpu_custom_call.1} parent=31 // pred_check_branch
          %533 = sbr.rel (%p531) target = $region48
        $region47: #{tpu_custom_call.1} parent=31 // pred_region
          %v534 = vld [vmem:[%s302] sm:$0xff]
          %v535 = vld [vmem:[%s302 + $0x8] sm:$0xff]
          %v536 = vld [vmem:[%s302 + $0x10] sm:$0xff]
          %v537 = vld [vmem:[%s315] sm:$0x1]
          %v539 = vlaneseq
          %v540 = vshrl.u32 %v539, 7
          %v541 = vsub.s32 0, %v540
          %v542 = vrot.slane %v537, %v541
          %v544 = vadd.f32 %v534, %v542
          %v545 = vadd.f32 %v535, %v542
          %v546 = vadd.f32 %v536, %v542
          %v547 = vmax.f32 %v544, 0.0
          %v548 = vmax.f32 %v545, 0.0
          %v549 = vmax.f32 %v546, 0.0
          %550 = vst [vmem:[%s302] sm:$0xff] %v547
          %551 = vst [vmem:[%s302 + $0x8] sm:$0xff] %v548
          %552 = vst [vmem:[%s302 + $0x10] sm:$0xff] %v549
          %v556 = vcombine.high %v547, %v547
          %v557 = vcombine.high %v548, %v548
          %v558 = vcombine.high %v549, %v549
          %vm562 = vcmask 1043456
          %v563 = vsel %vm562, %v547, 0.0
          %v564 = vrot.slane %v563, 4
          %v565 = vadd.f32 %v563, %v564
          %v566 = vrot.slane %v565, 2
          %v567 = vadd.f32 %v565, %v566
          %v568 = vrot.slane %v567, 1
          %v569 = vadd.f32 %v567, %v568
          %v570 = vsel %vm562, %v556, 0.0
          %v571 = vrot.slane %v570, 4
          %v572 = vadd.f32 %v570, %v571
          %v573 = vrot.slane %v572, 2
          %v574 = vadd.f32 %v572, %v573
          %v575 = vrot.slane %v574, 1
          %v576 = vadd.f32 %v574, %v575
          %v577 = vsel %vm562, %v548, 0.0
          %v578 = vrot.slane %v577, 4
          %v579 = vadd.f32 %v577, %v578
          %v580 = vrot.slane %v579, 2
          %v581 = vadd.f32 %v579, %v580
          %v582 = vrot.slane %v581, 1
          %v583 = vadd.f32 %v581, %v582
          %v584 = vsel %vm562, %v557, 0.0
          %v585 = vrot.slane %v584, 4
          %v586 = vadd.f32 %v584, %v585
          %v587 = vrot.slane %v586, 2
          %v588 = vadd.f32 %v586, %v587
          %v589 = vrot.slane %v588, 1
          %v590 = vadd.f32 %v588, %v589
          %v591 = vsel %vm562, %v549, 0.0
          %v592 = vrot.slane %v591, 4
          %v593 = vadd.f32 %v591, %v592
          %v594 = vrot.slane %v593, 2
          %v595 = vadd.f32 %v593, %v594
          %v596 = vrot.slane %v595, 1
          %v597 = vadd.f32 %v595, %v596
          %v598 = vsel %vm562, %v558, 0.0
          %v599 = vrot.slane %v598, 4
          %v600 = vadd.f32 %v598, %v599
          %v601 = vrot.slane %v600, 2
          %v602 = vadd.f32 %v600, %v601
          %v603 = vrot.slane %v602, 1
          %v604 = vadd.f32 %v602, %v603
          %v605 = vrcp.pop 4.0
          %v606 = vmul.f32 %v569, %v605
          %v607 = vmul.f32 %v576, %v605
          %v608 = vmul.f32 %v583, %v605
          %v609 = vmul.f32 %v590, %v605
          %v610 = vmul.f32 %v597, %v605
          %v611 = vmul.f32 %v604, %v605
          %vm618 = vcmask 1041409
          %v619 = vsel %vm618, %v607, %v606
          %vm620 = vcmask 1042434
          %v621 = vsel %vm620, %v608, %v619
          %vm622 = vcmask 1043459
          %v623 = vsel %vm622, %v609, %v621
          %vm624 = vcmask 1044484
          %v625 = vsel %vm624, %v610, %v623
          %vm626 = vcmask 1045509
          %v627 = vsel %vm626, %v611, %v625
          %629 = vst [vmem:[%s309] sm:$0x3f] %v627
        $region48: #{tpu_custom_call.1} parent=31 // pred_fallthru
          _
        %s630 = sand.u32 %s139, 1
        %s631 = scalar_lea.sflag [#allocation4], %s630
        %s632 = sand.u32 %s139, 1
        %s633 = smul.addr %s632, 24
        %s634 = scalar_lea.vmem [#allocation7], %s633
        %s635 = sand.u32 %s167, 1
        %s636 = scalar_lea.sflag [#allocation9], %s635
        %s637 = sand.u32 %s167, 1
        %s638 = smul.addr %s637, 8
        %s639 = scalar_lea.vmem [#allocation8], %s638
        // Predicated region
        $region49: #{tpu_custom_call.1} parent=31 // pred_check
          %p640 = pneg %p149
        $region50: #{tpu_custom_call.1} parent=31 // pred_check_branch
          %642 = sbr.rel (%p640) target = $region52
        $region51: #{tpu_custom_call.1} parent=31 // pred_region
          %s643 = smul.u32 3, %s33
          %s645 = ssub.s32 384, 384
          %646 = vsyncadd %s631, %s645
          %s647 = smul.addr %s643, 2
          %s648 = sadd.s32 %s34, %s647
          %s649 = smul.addr %s648, 128
          %s650 = scalar_lea.hbm %s3, %s649
          %s651 = sshll.u32 %s634, 4
          %s652 = int_to_ptr.vmem [resolvable:$true] %s651
          %657 = dma.vmem_to_hbm [thread:$0]  %s652, 384, %s650, %s631, 128, 256, 8
        $region52: #{tpu_custom_call.1} parent=31 // pred_fallthru
          _
        // Predicated region
        $region53: #{tpu_custom_call.1} parent=31 // pred_check
          %p658 = pneg %p177
        $region54: #{tpu_custom_call.1} parent=31 // pred_check_branch
          %660 = sbr.rel (%p658) target = $region56
        $region55: #{tpu_custom_call.1} parent=31 // pred_region
          %s662 = ssub.s32 128, 128
          %663 = vsyncadd %s636, %s662
          %s664 = smul.addr %s33, 2
          %s665 = sadd.s32 %s34, %s664
          %s666 = smul.addr %s665, 128
          %s667 = scalar_lea.hbm %s4, %s666
          %s669 = sshll.u32 %s639, 4
          %s670 = int_to_ptr.vmem [resolvable:$true] %s669
          %672 = dma.vmem_to_hbm [thread:$0]  %s670, 128, %s667, %s636
        $region56: #{tpu_custom_call.1} parent=31 // pred_fallthru
          _
      $region32: #{tpu_custom_call.1} parent=5 // pred_fallthru
        _
      %p673 = scmp.le.s32.totalorder 2, %s23
      // Predicated region
      $region57: #{tpu_custom_call.1} parent=5 // pred_check
        %p674 = pneg %p673
      $region58: #{tpu_custom_call.1} parent=5 // pred_check_branch
        %676 = sbr.rel (%p674) target = $region60
      $region59: #{tpu_custom_call.1} parent=5 // pred_region
        %s677 = ssub.s32 %s23, 2
        // Predicated region
        $region61: #{tpu_custom_call.1} parent=59 // pred_check
          %p678 = pneg %p155
        $region62: #{tpu_custom_call.1} parent=59 // pred_check_branch
          %680 = sbr.rel (%p678) target = $region64
        $region63: #{tpu_custom_call.1} parent=59 // pred_region
          %s681 = sand.u32 %s140, 1
          %s682 = scalar_lea.sflag [#allocation4], %s681
          %s683 = sand.u32 %s140, 1
          %s684 = smul.addr %s683, 24
          %s685 = scalar_lea.vmem [#allocation7], %s684
          %686 = dma.done %s682, 384
        $region64: #{tpu_custom_call.1} parent=59 // pred_fallthru
          _
        // Predicated region
        $region65: #{tpu_custom_call.1} parent=59 // pred_check
          %p687 = pneg %p183
        $region66: #{tpu_custom_call.1} parent=59 // pred_check_branch
          %689 = sbr.rel (%p687) target = $region68
        $region67: #{tpu_custom_call.1} parent=59 // pred_region
          %s690 = sand.u32 %s168, 1
          %s691 = scalar_lea.sflag [#allocation9], %s690
          %s692 = sand.u32 %s168, 1
          %s693 = smul.addr %s692, 8
          %s694 = scalar_lea.vmem [#allocation8], %s693
          %695 = dma.done %s691, 128
        $region68: #{tpu_custom_call.1} parent=59 // pred_fallthru
          _
      $region60: #{tpu_custom_call.1} parent=5 // pred_fallthru
        _
    $region6: #{tpu_custom_call.1} parent=1 // loop_footer
      %s27 = sadd.s32 1, %s23
    $region7: #{tpu_custom_call.1} parent=1 // loop_footer_branch
      %22 = sbr.rel target = $region3
    $region8: #{tpu_custom_call.1} parent=1 // loop_exit
      _
    %696 = vsyncpa [#allocation3], 1
    %s697 = scalar_lea.sflag [#allocation3], 1
    %698 = vsyncpa %s697, 1
    %699 = vsyncpa [#allocation6], 1
    %s700 = scalar_lea.sflag [#allocation6], 1
    %701 = vsyncpa %s700, 1
    %702 = vsyncpa [#allocation4], 1
    %s703 = scalar_lea.sflag [#allocation4], 1
    %704 = vsyncpa %s703, 1
    %705 = vsyncpa [#allocation9], 1
    %s706 = scalar_lea.sflag [#allocation9], 1
    %707 = vsyncpa %s706, 1

</llo_original>
